<compile_context>
chip_gen: v7x
topology: tpu7x:2x2x1
jax: 0.10.0
libtpu: 0.0.40
codegen_flags: <defaults>
</compile_context>

<pallas_src>
import jax
import jax.numpy as jnp
from jax.experimental import pallas as pl
from jax.experimental.pallas import tpu as pltpu

# Max sublane-rows (of 128 lanes) per grid step.  4096 rows * 128 lanes * 4 B
# = 2 MiB per channel; (2 in + 3 out) * 2 (double buffer) ~= 20 MiB VMEM.
_MAX_BLOCK_ROWS = 4096


def _cdiv(a: int, b: int) -> int:
    return (a + b - 1) // b


def _round_up(x: int, m: int) -> int:
    return _cdiv(x, m) * m


def _channel_product_kernel(x_ref, o_ref):
    # x_ref: (1, 2, rt, 128)   o_ref: (1, 3, rt, 128)
    ix = x_ref[0, 0]          # (rt, 128) -- full-occupancy vregs
    iy = x_ref[0, 1]
    o_ref[0, 0] = ix * ix     # I_xx
    o_ref[0, 1] = iy * iy     # I_yy
    o_ref[0, 2] = ix * iy     # I_xy


def channel_product(x: jax.Array) -> jax.Array:
    """x: (N, 2, H, W) -> (N, 3, H, W) with channels [Ixx, Iyy, Ixy]."""
    n, c, h, w = x.shape
    assert c == 2, "expected input with 2 channels (Ix, Iy)"
    hw = h * w

    # Re-tile the flattened spatial axis as (rows, 128).
    r_needed = _cdiv(hw, 128)
    if r_needed <= _MAX_BLOCK_ROWS:
        # Single tile: block rows == full array rows (no divisibility-by-8
        # requirement when the block spans the full dim).
        rt = r_needed
        rows = r_needed
    else:
        rt = _MAX_BLOCK_ROWS              # multiple of 8 (and 16 for bf16)
        rows = _round_up(r_needed, rt)
    hw_pad = rows * 128
    num_tiles = rows // rt

    x_flat = x.reshape(n, 2, hw)
    if hw_pad != hw:
        x_flat = jnp.pad(x_flat, ((0, 0), (0, 0), (0, hw_pad - hw)))
    x_tiled = x_flat.reshape(n, 2, rows, 128)   # contiguous reshape: free

    out_tiled = pl.pallas_call(
        _channel_product_kernel,
        out_shape=jax.ShapeDtypeStruct((n, 3, rows, 128), x.dtype),
        grid_spec=pl.GridSpec(
            grid=(n, num_tiles),
            in_specs=[
                pl.BlockSpec((1, 2, rt, 128), lambda i, j: (i, 0, j, 0)),
            ],
            out_specs=pl.BlockSpec((1, 3, rt, 128), lambda i, j: (i, 0, j, 0)),
        ),
        compiler_params=pltpu.CompilerParams(
            # Both grid axes are independent -> megacore sharding on v7x.
            dimension_semantics=("parallel", "parallel"),
            # ~20 MiB used at the largest tile; ample headroom on every
            # generation (v7x physical VMEM is 64 MiB per TensorCore).
            vmem_limit_bytes=48 * 1024 * 1024,
        ),
    )(x_tiled)

    out = out_tiled.reshape(n, 3, hw_pad)
    if hw_pad != hw:
        out = out[:, :, :hw]
    return out.reshape(n, 3, h, w)


if __name__ == "__main__":
    key = jax.random.PRNGKey(0)
    N, C, H, W = 2, 2, 16, 16
    x = jax.random.normal(key, (N, C, H, W), dtype=jnp.float32)

    out = channel_product(x)
    out = jax.block_until_ready(out)

    # Reference check in plain JAX (mirrors the PyTorch forward).
    ixx = (x[:, 0] * x[:, 0])[:, None]
    iyy = (x[:, 1] * x[:, 1])[:, None]
    ixy = (x[:, 0] * x[:, 1])[:, None]
    ref = jnp.concatenate([ixx, iyy, ixy], axis=1)

    assert out.shape == (N, 3, H, W), out.shape
    assert jnp.allclose(out, ref, atol=1e-6), "mismatch vs reference"
    print("KERNEL_OK")
</pallas_src>

<mosaic_0001>
module attributes {stable_mosaic.version = 11 : i64} {
  func.func @_channel_product_kernel(%arg0: i32, %arg1: i32, %arg2: memref<1x2x2x128xf32, #tpu.memory_space<vmem>>, %arg3: memref<1x3x2x128xf32, #tpu.memory_space<vmem>>) attributes {dimension_semantics = [#tpu.dimension_semantics<parallel>, #tpu.dimension_semantics<parallel>], iteration_bounds = array<i64: 2, 1>, scalar_prefetch = 0 : i64, scratch_operands = 0 : i64, tpu.core_type = #tpu.core_type<tc>, window_params = [{transform_indices = @transform_0, window_bounds = array<i64: 1, 2, 2, 128>}, {transform_indices = @transform_1, window_bounds = array<i64: 1, 3, 2, 128>}]} {
    %c0 = arith.constant 0 : index
    %c0_0 = arith.constant 0 : index
    %c0_1 = arith.constant 0 : index
    %c0_2 = arith.constant 0 : index
    %0 = vector.load %arg2[%c0, %c0_0, %c0_1, %c0_2] : memref<1x2x2x128xf32, #tpu.memory_space<vmem>>, vector<1x1x2x128xf32>
    %1 = vector.shape_cast %0 : vector<1x1x2x128xf32> to vector<2x128xf32>
    %c0_3 = arith.constant 0 : index
    %c1 = arith.constant 1 : index
    %c0_4 = arith.constant 0 : index
    %c0_5 = arith.constant 0 : index
    %2 = vector.load %arg2[%c0_3, %c1, %c0_4, %c0_5] : memref<1x2x2x128xf32, #tpu.memory_space<vmem>>, vector<1x1x2x128xf32>
    %3 = vector.shape_cast %2 : vector<1x1x2x128xf32> to vector<2x128xf32>
    %4 = arith.mulf %1, %1 : vector<2x128xf32>
    %c0_6 = arith.constant 0 : index
    %c0_7 = arith.constant 0 : index
    %c0_8 = arith.constant 0 : index
    %c0_9 = arith.constant 0 : index
    %5 = vector.load %arg3[%c0_6, %c0_7, %c0_8, %c0_9] : memref<1x3x2x128xf32, #tpu.memory_space<vmem>>, vector<1x1x2x128xf32>
    %6 = vector.shape_cast %5 : vector<1x1x2x128xf32> to vector<2x128xf32>
    %7 = vector.shape_cast %4 : vector<2x128xf32> to vector<1x1x2x128xf32>
    tpu.vector_store %arg3[%c0_6, %c0_7, %c0_8, %c0_9], %7 {strides = array<i32>} : memref<1x3x2x128xf32, #tpu.memory_space<vmem>>, vector<1x1x2x128xf32>,
    %8 = arith.mulf %3, %3 : vector<2x128xf32>
    %c0_10 = arith.constant 0 : index
    %c1_11 = arith.constant 1 : index
    %c0_12 = arith.constant 0 : index
    %c0_13 = arith.constant 0 : index
    %9 = vector.load %arg3[%c0_10, %c1_11, %c0_12, %c0_13] : memref<1x3x2x128xf32, #tpu.memory_space<vmem>>, vector<1x1x2x128xf32>
    %10 = vector.shape_cast %9 : vector<1x1x2x128xf32> to vector<2x128xf32>
    %11 = vector.shape_cast %8 : vector<2x128xf32> to vector<1x1x2x128xf32>
    tpu.vector_store %arg3[%c0_10, %c1_11, %c0_12, %c0_13], %11 {strides = array<i32>} : memref<1x3x2x128xf32, #tpu.memory_space<vmem>>, vector<1x1x2x128xf32>,
    %12 = arith.mulf %1, %3 : vector<2x128xf32>
    %c0_14 = arith.constant 0 : index
    %c2 = arith.constant 2 : index
    %c0_15 = arith.constant 0 : index
    %c0_16 = arith.constant 0 : index
    %13 = vector.load %arg3[%c0_14, %c2, %c0_15, %c0_16] : memref<1x3x2x128xf32, #tpu.memory_space<vmem>>, vector<1x1x2x128xf32>
    %14 = vector.shape_cast %13 : vector<1x1x2x128xf32> to vector<2x128xf32>
    %15 = vector.shape_cast %12 : vector<2x128xf32> to vector<1x1x2x128xf32>
    tpu.vector_store %arg3[%c0_14, %c2, %c0_15, %c0_16], %15 {strides = array<i32>} : memref<1x3x2x128xf32, #tpu.memory_space<vmem>>, vector<1x1x2x128xf32>,
    return
  }
  func.func @transform_0(%arg0: i32, %arg1: i32) -> (i32, i32, i32, i32) {
    %c0_i32 = arith.constant 0 : i32
    %c0_i32_0 = arith.constant 0 : i32
    %c0_i32_1 = arith.constant 0 : i32
    return %arg0, %c0_i32, %arg1, %c0_i32_0 : i32, i32, i32, i32
  }
  func.func @transform_1(%arg0: i32, %arg1: i32) -> (i32, i32, i32, i32) {
    %c0_i32 = arith.constant 0 : i32
    %c0_i32_0 = arith.constant 0 : i32
    %c0_i32_1 = arith.constant 0 : i32
    return %arg0, %c0_i32, %arg1, %c0_i32_0 : i32, i32, i32, i32
  }
}

</mosaic_0001>

<llo_original>
// kernel: tpu_custom_call.1
$region0: #{tpu_custom_call.1}
  #allocation0 [shape = 'u32[]', space=smem, size = 0x4, offset = 0x4, fixed_abs, tag = 'smem constant byte address 0x4 - core index']
  #allocation1 [shape = 'u32[144,128]{1,0:T(1,128)}', space=vmem, size = 0x12000, scoped, tag = 'internal scratch']
  %s0 = inlined_call_operand.hbm [shape: f32[2,2,2,128], index: 0, kind: input, shape index: {}]
  %s1 = inlined_call_operand.hbm [shape: f32[2,3,2,128], index: 1, kind: output, shape index: {}]
  %s2 = sld [smem:[#allocation0]]
  $region41: #{tpu_custom_call.1} parent=0
    _
  %s4 = ssub.s32 1, %s2
  %s5 = scalar_select 0, %s4, %s2
  $region1: #{tpu_custom_call.1} parent=0
    #allocation2 [shape = 'u8[4096]{0}', space=vmem, size = 0x1000, scoped, tag = 'input window, operand 0']
    #allocation3 [shape = 's32[2]{0}', space=sflag, size = 0x8, scoped, tag = 'scoped memory for tpu_custom_call.1']
    #allocation4 [shape = 's32[2]{0}', space=sflag, size = 0x8, scoped, tag = 'scoped memory for tpu_custom_call.1']
    #allocation5 [shape = 'u8[6144]{0}', space=vmem, size = 0x1800, scoped, tag = 'output window, operand 0']
    %6 = vsyncpa [#allocation3], 0
    %s7 = scalar_lea.sflag [#allocation3], 1
    %8 = vsyncpa %s7, 0
    %9 = vsyncpa [#allocation4], 0
    %s10 = scalar_lea.sflag [#allocation4], 1
    %11 = vsyncpa %s10, 0
    loop: start=0, step=1, limit=4
    $region2: #{tpu_custom_call.1} parent=1 // loop_pre_header
      _
    $region3: #{tpu_custom_call.1} parent=1 // loop_header
      %s13 = sphi 0, %s17
      %p14 = scmp.ge.s32.totalorder %s13, 4
      %s20 = sphi 0, %s32
      %s21 = sphi 0, %s28
      %s22 = sphi 0, %s20
      %s23 = sphi 0, %s21
      %s24 = sphi 0, %s22
      %s25 = sphi 0, %s23
      %s37 = sphi 0, %s39
      %s40 = sphi 0, %s37
      %s41 = sphi 0, %s40
      %s57 = sphi 0, %s41
      %s65 = sphi 0, %s67
      %s68 = sphi 0, %s65
      %s69 = sphi 0, %s68
      %s85 = sphi 0, %s69
    $region4: #{tpu_custom_call.1} parent=1 // loop_header_branch
      %16 = sbr.rel (%p14) target = $region8
    $region5: #{tpu_custom_call.1} parent=1 // loop_body
      %s18 = ssub.s32 %s13, 1
      %s19 = ssub.s32 %s13, 2
      %s26 = sadd.s32 1, %s21
      %p27 = scmp.ge.s32.totalorder %s26, 1
      %s28 = scalar_select %p27, 0, %s26
      %s29 = sadd.s32 1, %s20
      %s30 = scalar_select %p27, %s29, %s20
      %p31 = scmp.ge.s32.totalorder %s30, 2
      %s32 = scalar_select %p31, 0, %s30
      %s33 = ssub.s32 %s20, %s32
      %s34 = ssub.s32 %s21, %s28
      %s35 = sor.u32 %s33, %s34
      %p36 = scmp.eq.s32.totalorder %s35, 0
      %s38 = sadd.s32 %s37, 1
      %s39 = scalar_select %p36, %s37, %s38
      %p42 = pneg %p36
      %p43 = scmp.eq.s32.totalorder %s13, 1
      %p44 = por %p42, %p43
      %p45 = scmp.ne.s32.totalorder %s37, %s40
      %p46 = scmp.eq.s32.totalorder %s13, 0
      %p47 = por %p45, %p46
      %p48 = scmp.ne.s32.totalorder %s37, %s40
      %p49 = scmp.eq.s32.totalorder %s18, 1
      %p50 = por %p48, %p49
      %p51 = scmp.ne.s32.totalorder %s40, %s41
      %p52 = scmp.eq.s32.totalorder %s18, 0
      %p53 = por %p51, %p52
      %p54 = scmp.ne.s32.totalorder %s40, %s41
      %p55 = scmp.eq.s32.totalorder %s19, 1
      %p56 = por %p54, %p55
      %p58 = scmp.ne.s32.totalorder %s41, %s57
      %p59 = scmp.eq.s32.totalorder %s19, 0
      %p60 = por %p58, %p59
      %s61 = ssub.s32 %s20, %s32
      %s62 = ssub.s32 %s21, %s28
      %s63 = sor.u32 %s61, %s62
      %p64 = scmp.eq.s32.totalorder %s63, 0
      %s66 = sadd.s32 %s65, 1
      %s67 = scalar_select %p64, %s65, %s66
      %p70 = pneg %p64
      %p71 = scmp.eq.s32.totalorder %s13, 1
      %p72 = por %p70, %p71
      %p73 = scmp.ne.s32.totalorder %s65, %s68
      %p74 = scmp.eq.s32.totalorder %s13, 0
      %p75 = por %p73, %p74
      %p76 = scmp.ne.s32.totalorder %s65, %s68
      %p77 = scmp.eq.s32.totalorder %s18, 1
      %p78 = por %p76, %p77
      %p79 = scmp.ne.s32.totalorder %s68, %s69
      %p80 = scmp.eq.s32.totalorder %s18, 0
      %p81 = por %p79, %p80
      %p82 = scmp.ne.s32.totalorder %s68, %s69
      %p83 = scmp.eq.s32.totalorder %s19, 1
      %p84 = por %p82, %p83
      %p86 = scmp.ne.s32.totalorder %s69, %s85
      %p87 = scmp.eq.s32.totalorder %s19, 0
      %p88 = por %p86, %p87
      %p89 = scmp.le.s32.totalorder 1, %s13
      %p90 = scmp.lt.s32.totalorder %s13, 3
      %p91 = pnand %p89, %p90
      %p92 = pneg %p91
      // Predicated region
      $region9: #{tpu_custom_call.1} parent=5 // pred_check
        _
      $region10: #{tpu_custom_call.1} parent=5 // pred_check_branch
        %94 = sbr.rel (%p91) target = $region12
      $region11: #{tpu_custom_call.1} parent=5 // pred_region
        %s95 = ssub.s32 %s13, 1
      $region12: #{tpu_custom_call.1} parent=5 // pred_fallthru
        _
      %p96 = scmp.lt.s32.totalorder %s13, 2
      // Predicated region
      $region13: #{tpu_custom_call.1} parent=5 // pred_check
        %p97 = pneg %p96
      $region14: #{tpu_custom_call.1} parent=5 // pred_check_branch
        %99 = sbr.rel (%p97) target = $region16
      $region15: #{tpu_custom_call.1} parent=5 // pred_region
        // Predicated region
        $region17: #{tpu_custom_call.1} parent=15 // pred_check
          %p100 = pneg %p47
        $region18: #{tpu_custom_call.1} parent=15 // pred_check_branch
          %102 = sbr.rel (%p100) target = $region20
        $region19: #{tpu_custom_call.1} parent=15 // pred_region
          %s103 = sand.u32 %s37, 1
          %s104 = scalar_lea.sflag [#allocation3], %s103
          %s105 = sand.u32 %s37, 1
          %s106 = smul.addr %s105, 4
          %s107 = scalar_lea.vmem [#allocation2], %s106
          %s109 = ssub.s32 64, 64
          %110 = vsyncadd %s104, %s109
          %s111 = smul.addr %s20, 2
          %s112 = sadd.s32 %s21, %s111
          %s113 = smul.addr %s112, 32
          %s114 = scalar_lea.hbm %s0, %s113
          %s115 = sshll.u32 %s107, 4
          %s116 = int_to_ptr.vmem [resolvable:$true] %s115
          %121 = dma.hbm_to_vmem [thread:$0]  %s114, 64, %s116, %s104, 32, 32, 2
        $region20: #{tpu_custom_call.1} parent=15 // pred_fallthru
          _
      $region16: #{tpu_custom_call.1} parent=5 // pred_fallthru
        _
      %p122 = scmp.le.s32.totalorder 1, %s13
      %p123 = scmp.lt.s32.totalorder %s13, 3
      %p124 = pnand %p122, %p123
      %p125 = pneg %p124
      // Predicated region
      $region21: #{tpu_custom_call.1} parent=5 // pred_check
        _
      $region22: #{tpu_custom_call.1} parent=5 // pred_check_branch
        %127 = sbr.rel (%p124) target = $region24
      $region23: #{tpu_custom_call.1} parent=5 // pred_region
        %s128 = ssub.s32 %s13, 1
        %s129 = sand.u32 %s40, 1
        %s130 = scalar_lea.sflag [#allocation3], %s129
        %s131 = sand.u32 %s40, 1
        %s132 = smul.addr %s131, 4
        %s133 = scalar_lea.vmem [#allocation2], %s132
        // Predicated region
        $region25: #{tpu_custom_call.1} parent=23 // pred_check
          %p134 = pneg %p53
        $region26: #{tpu_custom_call.1} parent=23 // pred_check_branch
          %136 = sbr.rel (%p134) target = $region28
        $region27: #{tpu_custom_call.1} parent=23 // pred_region
          %137 = dma.done %s130, 64
        $region28: #{tpu_custom_call.1} parent=23 // pred_fallthru
          _
        %s138 = sand.u32 %s40, 1
        %s139 = scalar_lea.sflag [#allocation3], %s138
        %s140 = sand.u32 %s40, 1
        %s141 = smul.addr %s140, 4
        %s142 = scalar_lea.vmem [#allocation2], %s141
        %p143 = pneg %p53
        %p144 = pneg %p50
        %p145 = pneg %p81
        %p146 = pneg %p78
        %s147 = sand.u32 %s68, 1
        %s148 = scalar_lea.sflag [#allocation4], %s147
        %s149 = sand.u32 %s68, 1
        %s150 = smul.addr %s149, 6
        %s151 = scalar_lea.vmem [#allocation5], %s150
        %v152 = vld [vmem:[%s133] sm:$0x3]
        %s153 = scalar_lea.vmem %s133, 2 [#allocation2]
        %v154 = vld [vmem:[%s153] sm:$0x3]
        %v155 = vmul.f32 %v152, %v152
        %156 = vst [vmem:[%s151] sm:$0x3] %v155
        %v157 = vmul.f32 %v154, %v154
        %s158 = scalar_lea.vmem %s151, 2 [#allocation5]
        %159 = vst [vmem:[%s158] sm:$0x3] %v157
        %v160 = vmul.f32 %v152, %v154
        %s161 = scalar_lea.vmem %s151, 4 [#allocation5]
        %162 = vst [vmem:[%s161] sm:$0x3] %v160
        %s163 = sand.u32 %s68, 1
        %s164 = scalar_lea.sflag [#allocation4], %s163
        %s165 = sand.u32 %s68, 1
        %s166 = smul.addr %s165, 6
        %s167 = scalar_lea.vmem [#allocation5], %s166
        // Predicated region
        $region29: #{tpu_custom_call.1} parent=23 // pred_check
          %p168 = pneg %p78
        $region30: #{tpu_custom_call.1} parent=23 // pred_check_branch
          %170 = sbr.rel (%p168) target = $region32
        $region31: #{tpu_custom_call.1} parent=23 // pred_region
          %s172 = ssub.s32 96, 96
          %173 = vsyncadd %s164, %s172
          %s174 = smul.addr %s22, 3
          %s175 = sadd.s32 %s23, %s174
          %s176 = smul.addr %s175, 32
          %s177 = scalar_lea.hbm %s1, %s176
          %s178 = sshll.u32 %s167, 4
          %s179 = int_to_ptr.vmem [resolvable:$true] %s178
          %184 = dma.vmem_to_hbm [thread:$0]  %s179, 96, %s177, %s164, 32, 32, 2
        $region32: #{tpu_custom_call.1} parent=23 // pred_fallthru
          _
      $region24: #{tpu_custom_call.1} parent=5 // pred_fallthru
        _
      %p185 = scmp.le.s32.totalorder 2, %s13
      // Predicated region
      $region33: #{tpu_custom_call.1} parent=5 // pred_check
        %p186 = pneg %p185
      $region34: #{tpu_custom_call.1} parent=5 // pred_check_branch
        %188 = sbr.rel (%p186) target = $region36
      $region35: #{tpu_custom_call.1} parent=5 // pred_region
        %s189 = ssub.s32 %s13, 2
        // Predicated region
        $region37: #{tpu_custom_call.1} parent=35 // pred_check
          %p190 = pneg %p84
        $region38: #{tpu_custom_call.1} parent=35 // pred_check_branch
          %192 = sbr.rel (%p190) target = $region40
        $region39: #{tpu_custom_call.1} parent=35 // pred_region
          %s193 = sand.u32 %s69, 1
          %s194 = scalar_lea.sflag [#allocation4], %s193
          %s195 = sand.u32 %s69, 1
          %s196 = smul.addr %s195, 6
          %s197 = scalar_lea.vmem [#allocation5], %s196
          %198 = dma.done %s194, 96
        $region40: #{tpu_custom_call.1} parent=35 // pred_fallthru
          _
      $region36: #{tpu_custom_call.1} parent=5 // pred_fallthru
        _
    $region6: #{tpu_custom_call.1} parent=1 // loop_footer
      %s17 = sadd.s32 1, %s13
    $region7: #{tpu_custom_call.1} parent=1 // loop_footer_branch
      %12 = sbr.rel target = $region3
    $region8: #{tpu_custom_call.1} parent=1 // loop_exit
      _
    %199 = vsyncpa [#allocation3], 1
    %s200 = scalar_lea.sflag [#allocation3], 1
    %201 = vsyncpa %s200, 1
    %202 = vsyncpa [#allocation4], 1
    %s203 = scalar_lea.sflag [#allocation4], 1
    %204 = vsyncpa %s203, 1

</llo_original>
